<compile_context>
chip_gen: v6e
topology: v6e:2x2x1
jax: 0.10.0
libtpu: 0.0.40
codegen_flags: <defaults>
</compile_context>

<pallas_src>
import jax
import jax.numpy as jnp
from jax.experimental import pallas as pl
from jax.experimental.pallas import tpu as pltpu


_SQRT_2_OVER_PI = 0.7978845608028654


def _gelu_tanh(x):
    # tanh-approx GELU in f32 (tanh goes to the EUP -> hidden under the MXU).
    # TODO(synk): HF BERT default is exact (erf) GELU; tanh approx differs ~1e-3 rel.
    return 0.5 * x * (1.0 + jnp.tanh(_SQRT_2_OVER_PI * (x + 0.044715 * x * x * x)))


def intermediate_kernel(x_ref, w_ref, b_ref, o_ref):
    # x_ref: (tm, H) f32, w_ref: (H, tn) bf16, b_ref: (1, tn) f32, o_ref: (tm, tn) bf16
    # In-kernel bf16 cast of the activation tile (free VPU filler; avoids a
    # separate XLA cast pass and its extra HBM round-trip).
    x = x_ref[...].astype(jnp.bfloat16)
    acc = jnp.dot(x, w_ref[...], preferred_element_type=jnp.float32)
    acc = acc + b_ref[...]                       # f32 bias-add + GELU epilogue
    o_ref[...] = _gelu_tanh(acc).astype(o_ref.dtype)


# Conservative across generations (v7x has only 64 MiB physical VMEM per TC).
_VMEM_BUDGET = 40 * (1 << 20)


def _vmem_need(tm, tn, H):
    # Double-buffered VMEM footprint: x tile (f32), w block (bf16), bias (f32),
    # output tile (bf16).
    return 2 * (tm * H * 4 + H * tn * 2 + tn * 4 + tm * tn * 2)


def _choose_tiles(M, H, I, budget=_VMEM_BUDGET):
    """Pick (tm, tn, weight_resident); tn == I when the whole weight slab fits."""
    tm_cands = [t for t in (1024, 512, 256, 128, 64, 32, 16) if t <= M]
    if M <= 1024 and M not in tm_cands:
        tm_cands.insert(0, M)            # full-extent row block is always layout-legal
    if not tm_cands:
        tm_cands = [M]
    tm_cands = sorted(set(tm_cands), reverse=True)

    # Fast path: whole (H, I) weight resident in VMEM -> W read once from HBM,
    # activations and output stream exactly once.
    for tm in tm_cands:
        if _vmem_need(tm, I, H) <= budget:
            return tm, I, True

    # Fallback: tile output columns; with the column axis outermost the weight
    # block is invariant across the inner row sweep, so each W column block is
    # still read from HBM only once (X is re-streamed ceil(I/tn) times).
    tn_cands = [t for t in (1024, 512, 256, 128) if t <= I] or [I]
    for tn in tn_cands:
        for tm in tm_cands:
            if _vmem_need(tm, tn, H) <= budget:
                return tm, tn, False
    # TODO(synk): for very large H (>~8K) add an 'arbitrary' K axis over H with an
    # f32 accumulator scratch instead of shrinking tiles further.
    return tm_cands[-1], tn_cands[-1], False


def intermediate_forward(x, w, b):
    """Canonical BERT Intermediate: GELU(x @ W + b).

    x: (B, S, H) float32; w: (H, I) (ideally pre-cast/cached to bf16); b: (I,).
    Returns (B, S, I) bfloat16 (bf16 writeback halves the dominant HBM term).
    """
    B, S, H = x.shape
    I = w.shape[1]
    M = B * S

    x2d = x.reshape(M, H)                                    # stays f32; cast in-kernel
    w16 = w if w.dtype == jnp.bfloat16 else w.astype(jnp.bfloat16)
    b2d = b.reshape(1, I).astype(jnp.float32)

    tm, tn, resident = _choose_tiles(M, H, I)
    vmem_limit = int(_vmem_need(tm, tn, H) + (8 << 20))      # slack for internal scratch

    if resident:
        grid = (pl.cdiv(M, tm),)
        in_specs = [
            pl.BlockSpec((tm, H), lambda i: (i, 0)),         # activation rows stream once
            pl.BlockSpec((H, I), lambda i: (0, 0)),          # whole weight slab, resident
            pl.BlockSpec((1, I), lambda i: (0, 0)),          # bias, resident
        ]
        out_specs = pl.BlockSpec((tm, I), lambda i: (i, 0))
        dim_sem = ("parallel",)
        x_reads = 1
    else:
        grid = (pl.cdiv(I, tn), pl.cdiv(M, tm))              # j outer, i inner
        in_specs = [
            pl.BlockSpec((tm, H), lambda j, i: (i, 0)),      # re-streamed per column block
            pl.BlockSpec((H, tn), lambda j, i: (0, j)),      # invariant across inner sweep
            pl.BlockSpec((1, tn), lambda j, i: (0, j)),
        ]
        out_specs = pl.BlockSpec((tm, tn), lambda j, i: (i, j))
        dim_sem = ("parallel", "parallel")
        x_reads = pl.cdiv(I, tn)

    cost = pl.CostEstimate(
        flops=2 * M * H * I,
        transcendentals=M * I,
        bytes_accessed=(x_reads * M * H * 4) + (H * I * 2) + (I * 4) + (M * I * 2),
    )

    out = pl.pallas_call(
        intermediate_kernel,
        out_shape=jax.ShapeDtypeStruct((M, I), jnp.bfloat16),
        grid_spec=pl.GridSpec(
            grid=grid,
            in_specs=in_specs,
            out_specs=out_specs,
        ),
        compiler_params=pltpu.CompilerParams(
            dimension_semantics=dim_sem,
            vmem_limit_bytes=vmem_limit,
        ),
        cost_estimate=cost,
    )(x2d, w16, b2d)

    return out.reshape(B, S, I)


def reference_forward(x, w, b):
    # Pure f32 reference (same tanh GELU).  The kernel uses bf16 MXU inputs and a
    # bf16 output, so comparison tolerance is loosened accordingly.
    return _gelu_tanh(jnp.einsum("bsh,hi->bsi", x, w) + b)


if __name__ == "__main__":
    # Small shapes consistent with a transformer intermediate layer.
    B, S, H, I = 2, 8, 32, 128

    key = jax.random.PRNGKey(0)
    kx, kw, kb = jax.random.split(key, 3)
    x = jax.random.normal(kx, (B, S, H), dtype=jnp.float32)
    # Deterministic synthetic parameters (no checkpoint load).
    w = jax.random.normal(kw, (H, I), dtype=jnp.float32) * 0.02
    b = jax.random.normal(kb, (I,), dtype=jnp.float32) * 0.02

    # Cast/cache the weight to bf16 once, outside the per-call path.
    w_bf16 = w.astype(jnp.bfloat16)

    out = intermediate_forward(x, w_bf16, b)
    out = jax.block_until_ready(out)

    ref = reference_forward(x, w, b)
    assert out.shape == (B, S, I)
    assert out.dtype == jnp.bfloat16
    # bf16 matmul inputs + bf16 output with f32 accumulation -> relaxed tolerance.
    assert jnp.allclose(out.astype(jnp.float32), ref, atol=2e-2, rtol=2e-2)

    # TODO(synk): the original PyTorch forward returns an undefined `hidden_states`;
    # semantics implemented here follow the canonical BERT Intermediate (Linear+GELU).
    print("KERNEL_OK")
</pallas_src>

<mosaic_0001>
module attributes {stable_mosaic.version = 11 : i64} {
  func.func @intermediate_kernel(%arg0: i32, %arg1: memref<16x32xf32, #tpu.memory_space<vmem>>, %arg2: memref<32x128xbf16, #tpu.memory_space<vmem>>, %arg3: memref<1x128xf32, #tpu.memory_space<vmem>>, %arg4: memref<16x128xbf16, #tpu.memory_space<vmem>>) attributes {dimension_semantics = [#tpu.dimension_semantics<parallel>], iteration_bounds = array<i64: 1>, scalar_prefetch = 0 : i64, scratch_operands = 0 : i64, tpu.core_type = #tpu.core_type<tc>, window_params = [{transform_indices = @transform_0, window_bounds = array<i64: 16, 32>}, {pipeline_mode = #tpu.pipeline_mode<synchronous>, transform_indices = @transform_1, window_bounds = array<i64: 32, 128>}, {pipeline_mode = #tpu.pipeline_mode<synchronous>, transform_indices = @transform_2, window_bounds = array<i64: 1, 128>}, {transform_indices = @transform_3, window_bounds = array<i64: 16, 128>}]} {
    %c0 = arith.constant 0 : index
    %c0_0 = arith.constant 0 : index
    %0 = vector.load %arg1[%c0, %c0_0] : memref<16x32xf32, #tpu.memory_space<vmem>>, vector<16x32xf32>
    %1 = arith.truncf %0 : vector<16x32xf32> to vector<16x32xbf16>
    %c0_1 = arith.constant 0 : index
    %c0_2 = arith.constant 0 : index
    %2 = vector.load %arg2[%c0_1, %c0_2] : memref<32x128xbf16, #tpu.memory_space<vmem>>, vector<32x128xbf16>
    %cst = arith.constant dense<0.000000e+00> : vector<16x128xf32>
    %3 = tpu.matmul %1, %2, %cst {dimension_numbers = #tpu.dot_dimension_numbers<[1], [0], [0], [1], [0, 0, 1, 1], [], []>} : vector<16x32xbf16>, vector<32x128xbf16>, vector<16x128xf32> -> vector<16x128xf32>
    %c0_3 = arith.constant 0 : index
    %c0_4 = arith.constant 0 : index
    %4 = vector.load %arg3[%c0_3, %c0_4] : memref<1x128xf32, #tpu.memory_space<vmem>>, vector<1x128xf32>
    %5 = vector.broadcast %4 : vector<1x128xf32> to vector<16x128xf32>
    %6 = arith.addf %3, %5 : vector<16x128xf32>
    %cst_5 = arith.constant 5.000000e-01 : f32
    %7 = vector.broadcast %cst_5 : f32 to vector<16x128xf32>
    %8 = arith.mulf %7, %6 : vector<16x128xf32>
    %cst_6 = arith.constant 4.471500e-02 : f32
    %9 = vector.broadcast %cst_6 : f32 to vector<16x128xf32>
    %10 = arith.mulf %9, %6 : vector<16x128xf32>
    %11 = arith.mulf %10, %6 : vector<16x128xf32>
    %12 = arith.mulf %11, %6 : vector<16x128xf32>
    %13 = arith.addf %6, %12 : vector<16x128xf32>
    %cst_7 = arith.constant 0.797884583 : f32
    %14 = vector.broadcast %cst_7 : f32 to vector<16x128xf32>
    %15 = arith.mulf %14, %13 : vector<16x128xf32>
    %16 = math.tanh %15 : vector<16x128xf32>
    %cst_8 = arith.constant 1.000000e+00 : f32
    %17 = vector.broadcast %cst_8 : f32 to vector<16x128xf32>
    %18 = arith.addf %17, %16 : vector<16x128xf32>
    %19 = arith.mulf %8, %18 : vector<16x128xf32>
    %20 = arith.truncf %19 : vector<16x128xf32> to vector<16x128xbf16>
    %c0_9 = arith.constant 0 : index
    %c0_10 = arith.constant 0 : index
    %21 = vector.load %arg4[%c0_9, %c0_10] : memref<16x128xbf16, #tpu.memory_space<vmem>>, vector<16x128xbf16>
    tpu.vector_store %arg4[%c0_9, %c0_10], %20 {strides = array<i32>} : memref<16x128xbf16, #tpu.memory_space<vmem>>, vector<16x128xbf16>,
    return
  }
  func.func @transform_0(%arg0: i32) -> (i32, i32) {
    %c0_i32 = arith.constant 0 : i32
    %c0_i32_0 = arith.constant 0 : i32
    return %arg0, %c0_i32 : i32, i32
  }
  func.func @transform_1(%arg0: i32) -> (i32, i32) {
    %c0_i32 = arith.constant 0 : i32
    %c0_i32_0 = arith.constant 0 : i32
    %c0_i32_1 = arith.constant 0 : i32
    return %c0_i32, %c0_i32_0 : i32, i32
  }
  func.func @transform_2(%arg0: i32) -> (i32, i32) {
    %c0_i32 = arith.constant 0 : i32
    %c0_i32_0 = arith.constant 0 : i32
    %c0_i32_1 = arith.constant 0 : i32
    return %c0_i32, %c0_i32_0 : i32, i32
  }
  func.func @transform_3(%arg0: i32) -> (i32, i32) {
    %c0_i32 = arith.constant 0 : i32
    %c0_i32_0 = arith.constant 0 : i32
    return %arg0, %c0_i32 : i32, i32
  }
}

</mosaic_0001>

<llo_original>
// kernel: tpu_custom_call.1
$region0: #{tpu_custom_call.1}
  #allocation0 [shape = 'u32[]', space=smem, size = 0x4, offset = 0x4, fixed_abs, tag = 'smem constant byte address 0x4 - core index']
  #allocation1 [shape = 'u32[144,128]{1,0:T(1,128)}', space=vmem, size = 0x12000, scoped, tag = 'internal scratch']
  %s0 = inlined_call_operand.hbm [shape: f32[16,32], index: 0, kind: input, shape index: {}]
  %s1 = inlined_call_operand.hbm [shape: bf16[32,128], index: 1, kind: input, shape index: {}]
  %s2 = inlined_call_operand.vmem [shape: f32[1,128], index: 2, kind: input, shape index: {}]
  %s3 = inlined_call_operand.hbm [shape: bf16[16,128], index: 3, kind: output, shape index: {}]
  %s4 = sld [smem:[#allocation0]]
  $region30: #{tpu_custom_call.1} parent=0
    _
  %s6 = ssub.s32 1, %s4
  %s7 = scalar_select 0, %s6, %s4
  $region1: #{tpu_custom_call.1} parent=0
    #allocation2 [shape = 'u8[8192]{0}', space=vmem, size = 0x2000, scoped, tag = 'input window, operand 0, single buffered']
    #allocation3 [shape = 's32[1]{0}', space=sflag, size = 0x4, scoped, tag = 'scoped memory for tpu_custom_call.1']
    #allocation4 [shape = 's32[1]{0}', space=sflag, size = 0x4, scoped, tag = 'scoped memory for tpu_custom_call.1']
    #allocation5 [shape = 'u8[8192]{0}', space=vmem, size = 0x2000, scoped, tag = 'input window, operand 1, single buffered']
    #allocation6 [shape = 's32[1]{0}', space=sflag, size = 0x4, scoped, tag = 'scoped memory for tpu_custom_call.1']
    #allocation7 [shape = 'u8[4096]{0}', space=vmem, size = 0x1000, scoped, tag = 'output window, operand 0, single buffered']
    %8 = vsyncpa [#allocation3], 0
    %9 = vsyncpa [#allocation6], 0
    %10 = vsyncpa [#allocation4], 0
    // Predicated region
    $region2: #{tpu_custom_call.1} parent=1 // pred_check
      _
    $region3: #{tpu_custom_call.1} parent=1 // pred_check_branch
      %12 = sbr.rel (0) target = $region5
    $region4: #{tpu_custom_call.1} parent=1 // pred_region
      %s14 = ssub.s32 256, 256
      %15 = vsyncadd [#allocation3], %s14
      %s16 = sshll.u32 [#allocation2], 4
      %s17 = int_to_ptr.vmem [resolvable:$true] %s16
      %22 = dma.hbm_to_vmem [thread:$0]  %s0, 256, %s17, [#allocation3], 128, 128, 8
    $region5: #{tpu_custom_call.1} parent=1 // pred_fallthru
      _
    // Predicated region
    $region6: #{tpu_custom_call.1} parent=1 // pred_check
      _
    $region7: #{tpu_custom_call.1} parent=1 // pred_check_branch
      %24 = sbr.rel (0) target = $region9
    $region8: #{tpu_custom_call.1} parent=1 // pred_region
      %s26 = ssub.s32 256, 256
      %27 = vsyncadd [#allocation6], %s26
      %s28 = sshll.u32 [#allocation5], 4
      %s29 = int_to_ptr.vmem [resolvable:$true] %s28
      %34 = dma.hbm_to_vmem [thread:$0]  %s1, 256, %s29, [#allocation6], 64, 64, 4
    $region9: #{tpu_custom_call.1} parent=1 // pred_fallthru
      _
    // Predicated region
    $region10: #{tpu_custom_call.1} parent=1 // pred_check
      _
    $region11: #{tpu_custom_call.1} parent=1 // pred_check_branch
      %36 = sbr.rel (0) target = $region13
    $region12: #{tpu_custom_call.1} parent=1 // pred_region
      _
    $region13: #{tpu_custom_call.1} parent=1 // pred_fallthru
      _
    // Predicated region
    $region14: #{tpu_custom_call.1} parent=1 // pred_check
      _
    $region15: #{tpu_custom_call.1} parent=1 // pred_check_branch
      %38 = sbr.rel (0) target = $region17
    $region16: #{tpu_custom_call.1} parent=1 // pred_region
      %39 = dma.done [#allocation3], 256
    $region17: #{tpu_custom_call.1} parent=1 // pred_fallthru
      _
    // Predicated region
    $region18: #{tpu_custom_call.1} parent=1 // pred_check
      _
    $region19: #{tpu_custom_call.1} parent=1 // pred_check_branch
      %41 = sbr.rel (0) target = $region21
    $region20: #{tpu_custom_call.1} parent=1 // pred_region
      %42 = dma.done [#allocation6], 256
    $region21: #{tpu_custom_call.1} parent=1 // pred_fallthru
      _
    %v44 = vld [vmem:[#allocation2] sm:$0xff]
    %v45 = vld [vmem:[#allocation2 + $0x8] sm:$0xff]
    %v46 = vpack.c.bf16 %v45, %v44
    %v47 = vld [vmem:[#allocation5] sm:$0xf]
    %v48 = vld [vmem:[#allocation5 + $0x4] sm:$0xf]
    %v49 = vld [vmem:[#allocation5 + $0x8] sm:$0xf]
    %v50 = vld [vmem:[#allocation5 + $0xc] sm:$0xf]
    %v51 = vld [vmem:[%s2] sm:$0x1]
    %v53 = vlaneseq
    %v54 = vshrl.u32 %v53, 7
    %v55 = vsub.s32 0, %v54
    %v56 = vrot.slane %v51, %v55
    %v62 = vunpack.c.l.b16 %v47
    %v63 = vunpack.c.l.b16 %v48
    %v64 = vunpack.c.l.b16 %v49
    %v65 = vunpack.c.l.b16 %v50
    %v66 = vpack.c.b16 %v63, %v62
    %v67 = vpack.c.b16 %v65, %v64
    %vm70 = vcmask 261120
    %v72 = vsel %vm70, %v46, 0
    %74 = vmatprep.subr.bf16.mxu0 0
    %75 = vmatpush1.bf16.msra.mxu0 0
    %76 = vmatprep.subr.bf16.mxu0 0
    %77 = vmatpush1.bf16.msra.mxu0 0
    %78 = vmatprep.subr.bf16.mxu0 0
    %79 = vmatpush1.bf16.msra.mxu0 0
    %80 = vmatprep.subr.bf16.mxu0 0
    %81 = vmatpush1.bf16.msra.mxu0 0
    %82 = vmatprep.subr.bf16.mxu0 0
    %83 = vmatpush1.bf16.msra.mxu0 0
    %84 = vmatprep.subr.bf16.mxu0 0
    %85 = vmatpush1.bf16.msra.mxu0 0
    %86 = vmatprep.subr.bf16.mxu0 0
    %87 = vmatpush1.bf16.msra.mxu0 %v67
    %88 = vmatprep.subr.bf16.mxu0 0
    %89 = vmatpush1.bf16.msra.mxu0 %v66
    %90 = vmatprep.subr.bf16.mxu0 0
    %91 = vmatpush2.bf16.msra.mxu0 0
    %92 = vmatprep.subr.bf16.mxu0 0
    %93 = vmatpush2.bf16.msra.mxu0 0
    %94 = vmatprep.subr.bf16.mxu0 0
    %95 = vmatpush2.bf16.msra.mxu0 0
    %96 = vmatprep.subr.bf16.mxu0 0
    %97 = vmatpush2.bf16.msra.mxu0 0
    %98 = vmatprep.subr.bf16.mxu0 0
    %99 = vmatpush2.bf16.msra.mxu0 0
    %100 = vmatprep.subr.bf16.mxu0 0
    %101 = vmatpush2.bf16.msra.mxu0 0
    %102 = vmatprep.subr.bf16.mxu0 0
    %103 = vmatpush2.bf16.msra.mxu0 0
    %104 = vmatprep.subr.bf16.mxu0 0
    %105 = vmatpush2.bf16.msra.mxu0 0
    %106 = vmatprep.mubr.bf16.mxu0 0
    %107 = vmatmul.mubr.bf16.gmra.mxu0 %v72
    %v108 = vpop.f32.mrf.mxu0
    %v109 = vadd.f32 %v56, %v108
    %v110 = vpop.f32.mrf.mxu0
    %v111 = vpop.f32.mrf.mxu0
    %v112 = vadd.f32 %v56, %v111
    %v113 = vpop.f32.mrf.mxu0
    %114 = vdwg.mxu0
    %v115 = vmul.f32 %v109, 0.5
    %v116 = vmul.f32 %v112, 0.5
    %v117 = vmul.f32 %v109, 0.044715
    %v118 = vmul.f32 %v112, 0.044715
    %v119 = vmul.f32 %v117, %v109
    %v120 = vmul.f32 %v118, %v112
    %v121 = vmul.f32 %v119, %v109
    %v122 = vmul.f32 %v120, %v112
    %v123 = vadd.f32 %v109, %v121
    %v124 = vadd.f32 %v112, %v122
    %v125 = vmul.f32 %v123, 0.7978846
    %v126 = vmul.f32 %v124, 0.7978846
    %v127 = vtanh.pop %v125
    %v128 = vtanh.pop %v126
    %v129 = vadd.f32 %v127, 1.0
    %v130 = vadd.f32 %v128, 1.0
    %v131 = vmul.f32 %v115, %v129
    %v132 = vmul.f32 %v116, %v130
    %v133 = vpack.c.bf16 %v132, %v131
    %v135 = vunpack.c.l.b16 %v133
    %v136 = vunpack.c.h.b16 %v133
    %v137 = vpack.c.b16 %v135, %v135
    %v138 = vpack.c.b16 %v136, %v136
    %141 = vst [vmem:[#allocation7] sm:$0xf] %v137
    %142 = vst [vmem:[#allocation7 + $0x4] sm:$0xf] %v138
    // Predicated region
    $region22: #{tpu_custom_call.1} parent=1 // pred_check
      _
    $region23: #{tpu_custom_call.1} parent=1 // pred_check_branch
      %144 = sbr.rel (0) target = $region25
    $region24: #{tpu_custom_call.1} parent=1 // pred_region
      %s146 = ssub.s32 128, 128
      %147 = vsyncadd [#allocation4], %s146
      %s148 = sshll.u32 [#allocation7], 4
      %s149 = int_to_ptr.vmem [resolvable:$true] %s148
      %154 = dma.vmem_to_hbm [thread:$0]  %s149, 128, %s3, [#allocation4], 64, 64, 4
    $region25: #{tpu_custom_call.1} parent=1 // pred_fallthru
      _
    // Predicated region
    $region26: #{tpu_custom_call.1} parent=1 // pred_check
      _
    $region27: #{tpu_custom_call.1} parent=1 // pred_check_branch
      %156 = sbr.rel (0) target = $region29
    $region28: #{tpu_custom_call.1} parent=1 // pred_region
      %157 = dma.done [#allocation4], 128
    $region29: #{tpu_custom_call.1} parent=1 // pred_fallthru
      _
    %158 = vsyncpa [#allocation3], 1
    %159 = vsyncpa [#allocation6], 1
    %160 = vsyncpa [#allocation4], 1

</llo_original>
